<compile_context>
chip_gen: v7x
topology: tpu7x:2x2x1
jax: 0.10.0
libtpu: 0.0.40
codegen_flags: <defaults>
</compile_context>

<pallas_src>
import functools

import jax
import jax.numpy as jnp
import numpy as np
from jax import lax
from jax.experimental import pallas as pl
from jax.experimental.pallas import tpu as pltpu


def _round_up(x, m):
    return (x + m - 1) // m * m


# ----------------------------------------------------------------------------
# Pallas kernel: per-batch fused encoder (conv as 3 shifted matmuls + ReLU +
# matmul-pooling with an in-kernel iota mask) and fused classifier/discriminator
# head matmul.  One batch per grid step; everything stays in VMEM.
# ----------------------------------------------------------------------------
def dan_kernel(p_ref, wk_ref, bc_ref, wh_ref, bh_ref, out_ref, *, W, HW):
    """
    p_ref  : ((H+2)*W, 3C) bf16  width-im2col'd, height-padded image (one batch)
    wk_ref : (3, 3C, FP)   bf16  conv weight, one (3C, FP) slab per kh offset
    bc_ref : (1, FP)       f32   conv bias
    wh_ref : (FP, NHP)     bf16  fused [classifier | discriminator] weight
    bh_ref : (1, NHP)      f32   fused head bias
    out_ref: (8, NHP+FP)   f32   lane+sublane-dense output slab (row 0 is real)
    """
    p = p_ref[...]                                             # ((H+2)*W, 3C)

    # 3x3 conv = 3 height-shifted, sublane-aligned slices (offsets 0, W, 2W)
    # feeding accumulating MXU matmuls; f32 accumulation.
    conv = jnp.dot(p[0:HW, :], wk_ref[0], preferred_element_type=jnp.float32)
    conv += jnp.dot(p[W:W + HW, :], wk_ref[1], preferred_element_type=jnp.float32)
    conv += jnp.dot(p[2 * W:2 * W + HW, :], wk_ref[2],
                    preferred_element_type=jnp.float32)
    act = jnp.maximum(conv + bc_ref[...], 0.0)                 # (HW, FP) f32

    # Global average pool as an MXU matmul; the (8, HW) pool matrix is built
    # in-kernel from an iota compare (row 0 = 1/HW, rows 1..7 = 0) instead of
    # being DMA'd in.  Rows 1..7 exist only to keep the M dim sublane-dense.
    pool = jnp.where(lax.broadcasted_iota(jnp.int32, (8, HW), 0) == 0,
                     1.0 / HW, 0.0).astype(jnp.bfloat16)        # (8, HW)
    feat = jnp.dot(pool, act.astype(jnp.bfloat16),
                   preferred_element_type=jnp.float32)          # (8, FP)

    # ReverseLayerF / GradMultiplyLayerF are identity in forward, so the fused
    # [classifier | discriminator] head consumes the feature directly.
    heads = jnp.dot(feat.astype(jnp.bfloat16), wh_ref[...],
                    preferred_element_type=jnp.float32) + bh_ref[...]   # (8, NHP)

    # Single unmasked, lane+sublane-dense store of the whole slab.
    out_ref[...] = jnp.concatenate([heads, feat], axis=1)       # (8, NHP+FP)


# ----------------------------------------------------------------------------
# Glue.
# ----------------------------------------------------------------------------
def _prep_image(x):
    """(B, C, H, W) f32 -> (B, (H+2)*W, 3C) bf16: NHWC, spatially zero-padded,
    width-im2col'd (kw folded into the lane dim).  ~3x raw image bytes; the kh
    offsets are handled in-kernel via aligned sublane slices."""
    B, C, H, W = x.shape
    xh = jnp.transpose(x, (0, 2, 3, 1))                         # (B, H, W, C)
    xh = jnp.pad(xh, ((0, 0), (1, 1), (1, 1), (0, 0)))          # (B, H+2, W+2, C)
    cols = [xh[:, :, kw:kw + W, :] for kw in range(3)]          # 3 x (B, H+2, W, C)
    p = jnp.stack(cols, axis=3).reshape(B, H + 2, W, 3 * C)     # lane idx = kw*C + c
    return p.reshape(B, (H + 2) * W, 3 * C).astype(jnp.bfloat16)


def prepare_dan_params(w_conv, b_conv, w_m, b_m, w_d, b_d):
    """Static parameter plumbing, hoisted out of the per-call path (run once)."""
    F, C = w_conv.shape[0], w_conv.shape[1]
    NC, ND = w_m.shape[1], w_d.shape[1]
    FP = _round_up(F, 128)
    NHP = _round_up(NC + ND, 128)
    # Conv weight (F, C, 3, 3) -> (kh, kw*C + c, f), zero-padded to FP lanes.
    wk = jnp.transpose(w_conv, (2, 3, 1, 0)).reshape(3, 3 * C, F)
    wk = jnp.pad(wk, ((0, 0), (0, 0), (0, FP - F))).astype(jnp.bfloat16)
    bc = jnp.pad(b_conv.reshape(1, F), ((0, 0), (0, FP - F))).astype(jnp.float32)
    # Fused heads: [classifier | discriminator], zero-padded to (FP, NHP).
    wh = jnp.pad(jnp.concatenate([w_m, w_d], axis=1),
                 ((0, FP - F), (0, NHP - (NC + ND)))).astype(jnp.bfloat16)
    bh = jnp.pad(jnp.concatenate([b_m, b_d]).reshape(1, NC + ND),
                 ((0, 0), (0, NHP - (NC + ND)))).astype(jnp.float32)
    return {"wk": wk, "bc": bc, "wh": wh, "bh": bh}


@functools.partial(jax.jit, static_argnames=("n_classes", "n_domains", "n_features"))
def dan_forward(x, wk, bc, wh, bh, *, n_classes, n_domains, n_features):
    """DAN.forward(x): returns (class_output, domain_output, feature)."""
    B, C, H, W = x.shape
    HW = H * W
    HpW = (H + 2) * W
    K3C = 3 * C
    FP = wk.shape[2]
    NHP = wh.shape[1]
    OUT = NHP + FP

    # NOTE: in-kernel slices at offsets {0, W, 2W} are sublane-aligned when
    # W % 16 == 0 (bf16 packing); otherwise Mosaic inserts relayout copies.
    p = _prep_image(x)                               # (B, HpW, 3C) bf16

    out = pl.pallas_call(
        functools.partial(dan_kernel, W=W, HW=HW),
        out_shape=jax.ShapeDtypeStruct((B, 8, OUT), jnp.float32),
        grid_spec=pltpu.PrefetchScalarGridSpec(
            num_scalar_prefetch=0,
            grid=(B,),                                # one image per grid step
            in_specs=[
                pl.BlockSpec((None, HpW, K3C), lambda b: (b, 0, 0)),  # image
                pl.BlockSpec((3, K3C, FP), lambda b: (0, 0, 0)),      # conv weight
                pl.BlockSpec((1, FP), lambda b: (0, 0)),              # conv bias
                pl.BlockSpec((FP, NHP), lambda b: (0, 0)),            # head weight
                pl.BlockSpec((1, NHP), lambda b: (0, 0)),             # head bias
            ],
            out_specs=pl.BlockSpec((None, 8, OUT), lambda b: (b, 0, 0)),
        ),
        compiler_params=pltpu.CompilerParams(
            dimension_semantics=("parallel",)),       # megacore sharding on v7x
    )(p, wk, bc, wh, bh)

    # TODO(synk): at large H*W, further tile the per-batch rows along a second
    # ("arbitrary") grid axis with an (8, FP) feature accumulator in VMEM
    # scratch (pl.when init/finalize) and halo'd row blocks, plus an explicit
    # vmem_limit_bytes sized for v7x's 64 MiB VMEM.
    row = out[:, 0, :]                                # (B, OUT)
    cls = row[:, 0:n_classes]                         # class_output   (B, NC)
    dom = row[:, n_classes:n_classes + n_domains]     # domain_output  (B, ND)
    feat = row[:, NHP:NHP + n_features]               # feature        (B, F)
    return cls, dom, feat


# ----------------------------------------------------------------------------
# Pure-JAX reference (semantics check against the PyTorch graph).
# ----------------------------------------------------------------------------
def dan_forward_ref(x, w_conv, b_conv, w_m, b_m, w_d, b_d):
    conv = lax.conv_general_dilated(
        x, w_conv, window_strides=(1, 1), padding="SAME",
        dimension_numbers=("NCHW", "OIHW", "NCHW"))
    conv = conv + b_conv[None, :, None, None]
    act = jnp.maximum(conv, 0.0)
    feat = jnp.mean(act, axis=(2, 3))                 # (B, F)
    cls = feat @ w_m + b_m
    dom = feat @ w_d + b_d
    return cls, dom, feat


if __name__ == "__main__":
    # Small shapes: batch=2, channels=4, spatial=16x16, feature=32,
    # n_classes=10, n_domains=2.
    B, C, H, W = 2, 4, 16, 16
    F, NC, ND = 32, 10, 2

    key = jax.random.PRNGKey(0)
    kx, kwc, kbc, kwm, kbm, kwd, kbd = jax.random.split(key, 7)

    x = jax.random.normal(kx, (B, C, H, W), dtype=jnp.float32)
    w_conv = jax.random.normal(kwc, (F, C, 3, 3), dtype=jnp.float32) * (1.0 / np.sqrt(C * 9))
    b_conv = jax.random.normal(kbc, (F,), dtype=jnp.float32) * 0.01
    w_m = jax.random.normal(kwm, (F, NC), dtype=jnp.float32) * (1.0 / np.sqrt(F))
    b_m = jax.random.normal(kbm, (NC,), dtype=jnp.float32) * 0.01
    w_d = jax.random.normal(kwd, (F, ND), dtype=jnp.float32) * (1.0 / np.sqrt(F))
    b_d = jax.random.normal(kbd, (ND,), dtype=jnp.float32) * 0.01

    # Parameter plumbing runs once at "model init", not per forward call.
    params = prepare_dan_params(w_conv, b_conv, w_m, b_m, w_d, b_d)

    cls_out, dom_out, feat_out = dan_forward(
        x, params["wk"], params["bc"], params["wh"], params["bh"],
        n_classes=NC, n_domains=ND, n_features=F)
    jax.block_until_ready((cls_out, dom_out, feat_out))

    cls_ref, dom_ref, feat_ref = dan_forward_ref(x, w_conv, b_conv, w_m, b_m, w_d, b_d)
    # bf16 matmul operands with f32 accumulation -> loosened tolerances.
    np.testing.assert_allclose(np.asarray(feat_out), np.asarray(feat_ref), rtol=3e-2, atol=3e-2)
    np.testing.assert_allclose(np.asarray(cls_out), np.asarray(cls_ref), rtol=3e-2, atol=3e-2)
    np.testing.assert_allclose(np.asarray(dom_out), np.asarray(dom_ref), rtol=3e-2, atol=3e-2)

    # TODO(synk): ReverseLayerF / GradMultiplyLayerF only affect gradients; a
    # backward-pass kernel (grad negation/scaling) is out of scope for forward.
    print("KERNEL_OK")
</pallas_src>

<mosaic_0001>
module attributes {stable_mosaic.version = 11 : i64} {
  func.func @dan_kernel(%arg0: i32, %arg1: memref<1x288x12xbf16, #tpu.memory_space<vmem>>, %arg2: memref<3x12x128xbf16, #tpu.memory_space<vmem>>, %arg3: memref<1x128xf32, #tpu.memory_space<vmem>>, %arg4: memref<128x128xbf16, #tpu.memory_space<vmem>>, %arg5: memref<1x128xf32, #tpu.memory_space<vmem>>, %arg6: memref<1x8x256xf32, #tpu.memory_space<vmem>>) attributes {dimension_semantics = [#tpu.dimension_semantics<parallel>], iteration_bounds = array<i64: 2>, scalar_prefetch = 0 : i64, scratch_operands = 0 : i64, tpu.core_type = #tpu.core_type<tc>, window_params = [{transform_indices = @transform_0, window_bounds = array<i64: 1, 288, 12>}, {pipeline_mode = #tpu.pipeline_mode<synchronous>, transform_indices = @transform_1, window_bounds = array<i64: 3, 12, 128>}, {pipeline_mode = #tpu.pipeline_mode<synchronous>, transform_indices = @transform_2, window_bounds = array<i64: 1, 128>}, {pipeline_mode = #tpu.pipeline_mode<synchronous>, transform_indices = @transform_3, window_bounds = array<i64: 128, 128>}, {pipeline_mode = #tpu.pipeline_mode<synchronous>, transform_indices = @transform_4, window_bounds = array<i64: 1, 128>}, {transform_indices = @transform_5, window_bounds = array<i64: 1, 8, 256>}]} {
    %c0 = arith.constant 0 : index
    %c0_0 = arith.constant 0 : index
    %c0_1 = arith.constant 0 : index
    %0 = vector.load %arg1[%c0, %c0_0, %c0_1] : memref<1x288x12xbf16, #tpu.memory_space<vmem>>, vector<1x288x12xbf16>
    %1 = vector.shape_cast %0 : vector<1x288x12xbf16> to vector<288x12xbf16>
    %2 = vector.extract_strided_slice %1 {offsets = [0, 0], sizes = [256, 12], strides = [1, 1]} : vector<288x12xbf16> to vector<256x12xbf16>
    %c0_2 = arith.constant 0 : index
    %c0_3 = arith.constant 0 : index
    %c0_4 = arith.constant 0 : index
    %3 = vector.load %arg2[%c0_2, %c0_3, %c0_4] : memref<3x12x128xbf16, #tpu.memory_space<vmem>>, vector<1x12x128xbf16>
    %4 = vector.shape_cast %3 : vector<1x12x128xbf16> to vector<12x128xbf16>
    %cst = arith.constant dense<0.000000e+00> : vector<256x128xf32>
    %5 = tpu.matmul %2, %4, %cst {dimension_numbers = #tpu.dot_dimension_numbers<[1], [0], [0], [1], [0, 0, 1, 1], [], []>} : vector<256x12xbf16>, vector<12x128xbf16>, vector<256x128xf32> -> vector<256x128xf32>
    %6 = vector.extract_strided_slice %1 {offsets = [16, 0], sizes = [256, 12], strides = [1, 1]} : vector<288x12xbf16> to vector<256x12xbf16>
    %c1 = arith.constant 1 : index
    %c0_5 = arith.constant 0 : index
    %c0_6 = arith.constant 0 : index
    %7 = vector.load %arg2[%c1, %c0_5, %c0_6] : memref<3x12x128xbf16, #tpu.memory_space<vmem>>, vector<1x12x128xbf16>
    %8 = vector.shape_cast %7 : vector<1x12x128xbf16> to vector<12x128xbf16>
    %cst_7 = arith.constant dense<0.000000e+00> : vector<256x128xf32>
    %9 = tpu.matmul %6, %8, %cst_7 {dimension_numbers = #tpu.dot_dimension_numbers<[1], [0], [0], [1], [0, 0, 1, 1], [], []>} : vector<256x12xbf16>, vector<12x128xbf16>, vector<256x128xf32> -> vector<256x128xf32>
    %10 = arith.addf %5, %9 : vector<256x128xf32>
    %11 = vector.extract_strided_slice %1 {offsets = [32, 0], sizes = [256, 12], strides = [1, 1]} : vector<288x12xbf16> to vector<256x12xbf16>
    %c2 = arith.constant 2 : index
    %c0_8 = arith.constant 0 : index
    %c0_9 = arith.constant 0 : index
    %12 = vector.load %arg2[%c2, %c0_8, %c0_9] : memref<3x12x128xbf16, #tpu.memory_space<vmem>>, vector<1x12x128xbf16>
    %13 = vector.shape_cast %12 : vector<1x12x128xbf16> to vector<12x128xbf16>
    %cst_10 = arith.constant dense<0.000000e+00> : vector<256x128xf32>
    %14 = tpu.matmul %11, %13, %cst_10 {dimension_numbers = #tpu.dot_dimension_numbers<[1], [0], [0], [1], [0, 0, 1, 1], [], []>} : vector<256x12xbf16>, vector<12x128xbf16>, vector<256x128xf32> -> vector<256x128xf32>
    %15 = arith.addf %10, %14 : vector<256x128xf32>
    %c0_11 = arith.constant 0 : index
    %c0_12 = arith.constant 0 : index
    %16 = vector.load %arg3[%c0_11, %c0_12] : memref<1x128xf32, #tpu.memory_space<vmem>>, vector<1x128xf32>
    %17 = vector.broadcast %16 : vector<1x128xf32> to vector<256x128xf32>
    %18 = arith.addf %15, %17 : vector<256x128xf32>
    %cst_13 = arith.constant 0.000000e+00 : f32
    %19 = vector.broadcast %cst_13 : f32 to vector<256x128xf32>
    %20 = arith.maximumf %18, %19 : vector<256x128xf32>
    %21 = tpu.iota {dimensions = array<i32: 0>} : vector<8x256xi32>
    %c0_i32 = arith.constant 0 : i32
    %22 = vector.broadcast %c0_i32 : i32 to vector<8x256xi32>
    %23 = arith.cmpi eq, %21, %22 : vector<8x256xi32>
    %cst_14 = arith.constant 3.906250e-03 : f32
    %cst_15 = arith.constant 0.000000e+00 : f32
    %24 = vector.broadcast %cst_14 : f32 to vector<8x256xf32>
    %25 = vector.broadcast %cst_15 : f32 to vector<8x256xf32>
    %26 = arith.select %23, %24, %25 : vector<8x256xi1>, vector<8x256xf32>
    %27 = arith.truncf %26 : vector<8x256xf32> to vector<8x256xbf16>
    %28 = arith.truncf %20 : vector<256x128xf32> to vector<256x128xbf16>
    %cst_16 = arith.constant dense<0.000000e+00> : vector<8x128xf32>
    %29 = tpu.matmul %27, %28, %cst_16 {dimension_numbers = #tpu.dot_dimension_numbers<[1], [0], [0], [1], [0, 0, 1, 1], [], []>} : vector<8x256xbf16>, vector<256x128xbf16>, vector<8x128xf32> -> vector<8x128xf32>
    %30 = arith.truncf %29 : vector<8x128xf32> to vector<8x128xbf16>
    %c0_17 = arith.constant 0 : index
    %c0_18 = arith.constant 0 : index
    %31 = vector.load %arg4[%c0_17, %c0_18] : memref<128x128xbf16, #tpu.memory_space<vmem>>, vector<128x128xbf16>
    %cst_19 = arith.constant dense<0.000000e+00> : vector<8x128xf32>
    %32 = tpu.matmul %30, %31, %cst_19 {dimension_numbers = #tpu.dot_dimension_numbers<[1], [0], [0], [1], [0, 0, 1, 1], [], []>} : vector<8x128xbf16>, vector<128x128xbf16>, vector<8x128xf32> -> vector<8x128xf32>
    %c0_20 = arith.constant 0 : index
    %c0_21 = arith.constant 0 : index
    %33 = vector.load %arg5[%c0_20, %c0_21] : memref<1x128xf32, #tpu.memory_space<vmem>>, vector<1x128xf32>
    %34 = vector.broadcast %33 : vector<1x128xf32> to vector<8x128xf32>
    %35 = arith.addf %32, %34 : vector<8x128xf32>
    %36 = tpu.concatenate %35, %29 in 1 : vector<8x128xf32>, vector<8x128xf32> -> vector<8x256xf32>
    %c0_22 = arith.constant 0 : index
    %c0_23 = arith.constant 0 : index
    %c0_24 = arith.constant 0 : index
    %37 = vector.load %arg6[%c0_22, %c0_23, %c0_24] : memref<1x8x256xf32, #tpu.memory_space<vmem>>, vector<1x8x256xf32>
    %38 = vector.shape_cast %37 : vector<1x8x256xf32> to vector<8x256xf32>
    %39 = vector.shape_cast %36 : vector<8x256xf32> to vector<1x8x256xf32>
    tpu.vector_store %arg6[%c0_22, %c0_23, %c0_24], %39 {strides = array<i32>} : memref<1x8x256xf32, #tpu.memory_space<vmem>>, vector<1x8x256xf32>,
    return
  }
  func.func @transform_0(%arg0: i32) -> (i32, i32, i32) {
    %c0_i32 = arith.constant 0 : i32
    %c0_i32_0 = arith.constant 0 : i32
    %c0_i32_1 = arith.constant 0 : i32
    return %arg0, %c0_i32, %c0_i32_0 : i32, i32, i32
  }
  func.func @transform_1(%arg0: i32) -> (i32, i32, i32) {
    %c0_i32 = arith.constant 0 : i32
    %c0_i32_0 = arith.constant 0 : i32
    %c0_i32_1 = arith.constant 0 : i32
    %c0_i32_2 = arith.constant 0 : i32
    return %c0_i32, %c0_i32_0, %c0_i32_1 : i32, i32, i32
  }
  func.func @transform_2(%arg0: i32) -> (i32, i32) {
    %c0_i32 = arith.constant 0 : i32
    %c0_i32_0 = arith.constant 0 : i32
    %c0_i32_1 = arith.constant 0 : i32
    return %c0_i32, %c0_i32_0 : i32, i32
  }
  func.func @transform_3(%arg0: i32) -> (i32, i32) {
    %c0_i32 = arith.constant 0 : i32
    %c0_i32_0 = arith.constant 0 : i32
    %c0_i32_1 = arith.constant 0 : i32
    return %c0_i32, %c0_i32_0 : i32, i32
  }
  func.func @transform_4(%arg0: i32) -> (i32, i32) {
    %c0_i32 = arith.constant 0 : i32
    %c0_i32_0 = arith.constant 0 : i32
    %c0_i32_1 = arith.constant 0 : i32
    return %c0_i32, %c0_i32_0 : i32, i32
  }
  func.func @transform_5(%arg0: i32) -> (i32, i32, i32) {
    %c0_i32 = arith.constant 0 : i32
    %c0_i32_0 = arith.constant 0 : i32
    %c0_i32_1 = arith.constant 0 : i32
    return %arg0, %c0_i32, %c0_i32_0 : i32, i32, i32
  }
}

</mosaic_0001>

<llo_original>
// kernel: dan_forward.1
$region0: #{dan_forward.1}
  #allocation0 [shape = 'u32[]', space=smem, size = 0x4, offset = 0x4, fixed_abs, tag = 'smem constant byte address 0x4 - core index']
  #allocation1 [shape = 'u32[144,128]{1,0:T(1,128)}', space=vmem, size = 0x12000, scoped, tag = 'internal scratch']
  %s0 = inlined_call_operand.vmem [shape: bf16[2,288,12], index: 0, kind: input, shape index: {}]
  %s1 = inlined_call_operand.vmem [shape: bf16[3,12,128], index: 1, kind: input, shape index: {}]
  %s2 = inlined_call_operand.vmem [shape: f32[1,128], index: 2, kind: input, shape index: {}]
  %s3 = inlined_call_operand.vmem [shape: bf16[128,128], index: 3, kind: input, shape index: {}]
  %s4 = inlined_call_operand.vmem [shape: f32[1,128], index: 4, kind: input, shape index: {}]
  %s5 = inlined_call_operand.vmem [shape: f32[2,8,256], index: 5, kind: output, shape index: {}]
  %s6 = sld [smem:[#allocation0]]
  $region53: #{dan_forward.1} parent=0
    _
  %s8 = ssub.s32 1, %s6
  %s9 = scalar_select 0, %s8, %s6
  loop: start=0, step=1, limit=4
  $region2: #{dan_forward.1} parent=0 // loop_pre_header
    _
  $region3: #{dan_forward.1} parent=0 // loop_header
    %s11 = sphi 0, %s15
    %p12 = scmp.ge.s32.totalorder %s11, 4
    %s21 = sphi 0, %s23
    %s24 = sphi 0, %s21
    %s25 = sphi 0, %s24
    %s41 = sphi 0, %s25
    %s45 = sphi 0, %s45
    %s47 = sphi 0, %s45
    %s48 = sphi 0, %s47
    %s62 = sphi 0, %s48
    %s66 = sphi 0, %s66
    %s68 = sphi 0, %s66
    %s69 = sphi 0, %s68
    %s83 = sphi 0, %s69
    %s87 = sphi 0, %s87
    %s89 = sphi 0, %s87
    %s90 = sphi 0, %s89
    %s104 = sphi 0, %s90
    %s108 = sphi 0, %s108
    %s110 = sphi 0, %s108
    %s111 = sphi 0, %s110
    %s125 = sphi 0, %s111
    %s131 = sphi 0, %s133
    %s134 = sphi 0, %s131
    %s135 = sphi 0, %s134
    %s151 = sphi 0, %s135
  $region4: #{dan_forward.1} parent=0 // loop_header_branch
    %14 = sbr.rel (%p12) target = $region8
  $region5: #{dan_forward.1} parent=0 // loop_body
    %s16 = ssub.s32 %s11, 1
    %s17 = ssub.s32 %s11, 2
    %s18 = sadd.s32 %s11, 1
    %s19 = ssub.s32 %s11, %s18
    %p20 = scmp.eq.s32.totalorder %s19, 0
    %s22 = sadd.s32 %s21, 1
    %s23 = scalar_select %p20, %s21, %s22
    %p26 = pneg %p20
    %p27 = scmp.eq.s32.totalorder %s11, 1
    %p28 = por %p26, %p27
    %p29 = scmp.ne.s32.totalorder %s21, %s24
    %p30 = scmp.eq.s32.totalorder %s11, 0
    %p31 = por %p29, %p30
    %p32 = scmp.ne.s32.totalorder %s21, %s24
    %p33 = scmp.eq.s32.totalorder %s16, 1
    %p34 = por %p32, %p33
    %p35 = scmp.ne.s32.totalorder %s24, %s25
    %p36 = scmp.eq.s32.totalorder %s16, 0
    %p37 = por %p35, %p36
    %p38 = scmp.ne.s32.totalorder %s24, %s25
    %p39 = scmp.eq.s32.totalorder %s17, 1
    %p40 = por %p38, %p39
    %p42 = scmp.ne.s32.totalorder %s25, %s41
    %p43 = scmp.eq.s32.totalorder %s17, 0
    %p44 = por %p42, %p43
    %s46 = sadd.s32 %s45, 1
    %p49 = scmp.eq.s32.totalorder %s11, 1
    %p50 = scmp.ne.s32.totalorder %s45, %s47
    %p51 = scmp.eq.s32.totalorder %s11, 0
    %p52 = por %p50, %p51
    %p53 = scmp.ne.s32.totalorder %s45, %s47
    %p54 = scmp.eq.s32.totalorder %s16, 1
    %p55 = por %p53, %p54
    %p56 = scmp.ne.s32.totalorder %s47, %s48
    %p57 = scmp.eq.s32.totalorder %s16, 0
    %p58 = por %p56, %p57
    %p59 = scmp.ne.s32.totalorder %s47, %s48
    %p60 = scmp.eq.s32.totalorder %s17, 1
    %p61 = por %p59, %p60
    %p63 = scmp.ne.s32.totalorder %s48, %s62
    %p64 = scmp.eq.s32.totalorder %s17, 0
    %p65 = por %p63, %p64
    %s67 = sadd.s32 %s66, 1
    %p70 = scmp.eq.s32.totalorder %s11, 1
    %p71 = scmp.ne.s32.totalorder %s66, %s68
    %p72 = scmp.eq.s32.totalorder %s11, 0
    %p73 = por %p71, %p72
    %p74 = scmp.ne.s32.totalorder %s66, %s68
    %p75 = scmp.eq.s32.totalorder %s16, 1
    %p76 = por %p74, %p75
    %p77 = scmp.ne.s32.totalorder %s68, %s69
    %p78 = scmp.eq.s32.totalorder %s16, 0
    %p79 = por %p77, %p78
    %p80 = scmp.ne.s32.totalorder %s68, %s69
    %p81 = scmp.eq.s32.totalorder %s17, 1
    %p82 = por %p80, %p81
    %p84 = scmp.ne.s32.totalorder %s69, %s83
    %p85 = scmp.eq.s32.totalorder %s17, 0
    %p86 = por %p84, %p85
    %s88 = sadd.s32 %s87, 1
    %p91 = scmp.eq.s32.totalorder %s11, 1
    %p92 = scmp.ne.s32.totalorder %s87, %s89
    %p93 = scmp.eq.s32.totalorder %s11, 0
    %p94 = por %p92, %p93
    %p95 = scmp.ne.s32.totalorder %s87, %s89
    %p96 = scmp.eq.s32.totalorder %s16, 1
    %p97 = por %p95, %p96
    %p98 = scmp.ne.s32.totalorder %s89, %s90
    %p99 = scmp.eq.s32.totalorder %s16, 0
    %p100 = por %p98, %p99
    %p101 = scmp.ne.s32.totalorder %s89, %s90
    %p102 = scmp.eq.s32.totalorder %s17, 1
    %p103 = por %p101, %p102
    %p105 = scmp.ne.s32.totalorder %s90, %s104
    %p106 = scmp.eq.s32.totalorder %s17, 0
    %p107 = por %p105, %p106
    %s109 = sadd.s32 %s108, 1
    %p112 = scmp.eq.s32.totalorder %s11, 1
    %p113 = scmp.ne.s32.totalorder %s108, %s110
    %p114 = scmp.eq.s32.totalorder %s11, 0
    %p115 = por %p113, %p114
    %p116 = scmp.ne.s32.totalorder %s108, %s110
    %p117 = scmp.eq.s32.totalorder %s16, 1
    %p118 = por %p116, %p117
    %p119 = scmp.ne.s32.totalorder %s110, %s111
    %p120 = scmp.eq.s32.totalorder %s16, 0
    %p121 = por %p119, %p120
    %p122 = scmp.ne.s32.totalorder %s110, %s111
    %p123 = scmp.eq.s32.totalorder %s17, 1
    %p124 = por %p122, %p123
    %p126 = scmp.ne.s32.totalorder %s111, %s125
    %p127 = scmp.eq.s32.totalorder %s17, 0
    %p128 = por %p126, %p127
    %s129 = ssub.s32 %s11, %s18
    %p130 = scmp.eq.s32.totalorder %s129, 0
    %s132 = sadd.s32 %s131, 1
    %s133 = scalar_select %p130, %s131, %s132
    %p136 = pneg %p130
    %p137 = scmp.eq.s32.totalorder %s11, 1
    %p138 = por %p136, %p137
    %p139 = scmp.ne.s32.totalorder %s131, %s134
    %p140 = scmp.eq.s32.totalorder %s11, 0
    %p141 = por %p139, %p140
    %p142 = scmp.ne.s32.totalorder %s131, %s134
    %p143 = scmp.eq.s32.totalorder %s16, 1
    %p144 = por %p142, %p143
    %p145 = scmp.ne.s32.totalorder %s134, %s135
    %p146 = scmp.eq.s32.totalorder %s16, 0
    %p147 = por %p145, %p146
    %p148 = scmp.ne.s32.totalorder %s134, %s135
    %p149 = scmp.eq.s32.totalorder %s17, 1
    %p150 = por %p148, %p149
    %p152 = scmp.ne.s32.totalorder %s135, %s151
    %p153 = scmp.eq.s32.totalorder %s17, 0
    %p154 = por %p152, %p153
    %p155 = scmp.le.s32.totalorder 1, %s11
    %p156 = scmp.lt.s32.totalorder %s11, 3
    %p157 = pnand %p155, %p156
    %p158 = pneg %p157
    // Predicated region
    $region9: #{dan_forward.1} parent=5 // pred_check
      _
    $region10: #{dan_forward.1} parent=5 // pred_check_branch
      %160 = sbr.rel (%p157) target = $region12
    $region11: #{dan_forward.1} parent=5 // pred_region
      %s161 = ssub.s32 %s11, 1
      // Predicated region
      $region13: #{dan_forward.1} parent=11 // pred_check
        %p162 = pneg %p58
      $region14: #{dan_forward.1} parent=11 // pred_check_branch
        %164 = sbr.rel (%p162) target = $region16
      $region15: #{dan_forward.1} parent=11 // pred_region
        _
      $region16: #{dan_forward.1} parent=11 // pred_fallthru
        _
      // Predicated region
      $region17: #{dan_forward.1} parent=11 // pred_check
        %p165 = pneg %p79
      $region18: #{dan_forward.1} parent=11 // pred_check_branch
        %167 = sbr.rel (%p165) target = $region20
      $region19: #{dan_forward.1} parent=11 // pred_region
        _
      $region20: #{dan_forward.1} parent=11 // pred_fallthru
        _
      // Predicated region
      $region21: #{dan_forward.1} parent=11 // pred_check
        %p168 = pneg %p100
      $region22: #{dan_forward.1} parent=11 // pred_check_branch
        %170 = sbr.rel (%p168) target = $region24
      $region23: #{dan_forward.1} parent=11 // pred_region
        _
      $region24: #{dan_forward.1} parent=11 // pred_fallthru
        _
      // Predicated region
      $region25: #{dan_forward.1} parent=11 // pred_check
        %p171 = pneg %p121
      $region26: #{dan_forward.1} parent=11 // pred_check_branch
        %173 = sbr.rel (%p171) target = $region28
      $region27: #{dan_forward.1} parent=11 // pred_region
        _
      $region28: #{dan_forward.1} parent=11 // pred_fallthru
        _
    $region12: #{dan_forward.1} parent=5 // pred_fallthru
      _
    %p174 = scmp.lt.s32.totalorder %s11, 2
    // Predicated region
    $region29: #{dan_forward.1} parent=5 // pred_check
      %p175 = pneg %p174
    $region30: #{dan_forward.1} parent=5 // pred_check_branch
      %177 = sbr.rel (%p175) target = $region32
    $region31: #{dan_forward.1} parent=5 // pred_region
      // Predicated region
      $region33: #{dan_forward.1} parent=31 // pred_check
        %p178 = pneg %p31
      $region34: #{dan_forward.1} parent=31 // pred_check_branch
        %180 = sbr.rel (%p178) target = $region36
      $region35: #{dan_forward.1} parent=31 // pred_region
        %p181 = scmp.lt.s32.totalorder %s11, 1
        %s182 = scalar_select %p181, %s11, 1
        %s183 = smul.addr %s182, 36
        %s184 = smul.addr %s183, 4
        %s185 = scalar_lea.vmem %s0, %s184
      $region36: #{dan_forward.1} parent=31 // pred_fallthru
        _
    $region32: #{dan_forward.1} parent=5 // pred_fallthru
      _
    %p186 = scmp.le.s32.totalorder 1, %s11
    %p187 = scmp.lt.s32.totalorder %s11, 3
    %p188 = pnand %p186, %p187
    %p189 = pneg %p188
    // Predicated region
    $region37: #{dan_forward.1} parent=5 // pred_check
      _
    $region38: #{dan_forward.1} parent=5 // pred_check_branch
      %191 = sbr.rel (%p188) target = $region40
    $region39: #{dan_forward.1} parent=5 // pred_region
      %s192 = ssub.s32 %s11, 1
      %p193 = scmp.lt.s32.totalorder %s16, 1
      %s194 = scalar_select %p193, %s16, 1
      %s195 = smul.addr %s194, 36
      %s196 = smul.addr %s195, 4
      %s197 = scalar_lea.vmem %s0, %s196
      %p198 = pneg %p37
      %p199 = pneg %p34
      %p200 = pneg %p58
      %p201 = pneg %p55
      %p202 = pneg %p79
      %p203 = pneg %p76
      %p204 = pneg %p100
      %p205 = pneg %p97
      %p206 = pneg %p121
      %p207 = pneg %p118
      %p208 = pneg %p147
      %p209 = pneg %p144
      %p210 = scmp.lt.s32.totalorder %s16, 1
      %s211 = scalar_select %p210, %s16, 1
      %s212 = smul.addr %s211, 2
      %s213 = smul.addr %s212, 8
      %s214 = scalar_lea.vmem %s5, %s213
      %p215 = scmp.lt.s32.totalorder %s16, 1
      %s216 = scalar_select %p215, %s16, 1
      %s217 = smul.addr %s216, 36
      %s218 = smul.addr %s217, 4
      %s219 = scalar_lea.vmem %s0, %s218
      %p220 = scmp.lt.s32.totalorder %s16, 1
      %s221 = scalar_select %p220, %s16, 1
      %s222 = smul.addr %s221, 2
      %s223 = smul.addr %s222, 8
      %s224 = scalar_lea.vmem %s5, %s223
      %v226 = vld [vmem:[%s219] sm:$0xf]
      %v227 = vld [vmem:[%s219 + $0x4] sm:$0xf]
      %v228 = vld [vmem:[%s219 + $0x8] sm:$0xf]
      %v229 = vld [vmem:[%s219 + $0xc] sm:$0xf]
      %v230 = vld [vmem:[%s219 + $0x10] sm:$0xf]
      %v231 = vld [vmem:[%s219 + $0x14] sm:$0xf]
      %v232 = vld [vmem:[%s219 + $0x18] sm:$0xf]
      %v233 = vld [vmem:[%s219 + $0x1c] sm:$0xf]
      %v234 = vld [vmem:[%s219 + $0x20] sm:$0xf]
      %v235 = vld [vmem:[%s219 + $0x24] sm:$0xf]
      %v236 = vld [vmem:[%s219 + $0x28] sm:$0xf]
      %v237 = vld [vmem:[%s219 + $0x2c] sm:$0xf]
      %v238 = vld [vmem:[%s219 + $0x30] sm:$0xf]
      %v239 = vld [vmem:[%s219 + $0x34] sm:$0xf]
      %v240 = vld [vmem:[%s219 + $0x38] sm:$0xf]
      %v241 = vld [vmem:[%s219 + $0x3c] sm:$0xf]
      %v242 = vld [vmem:[%s219 + $0x40] sm:$0xf]
      %v243 = vld [vmem:[%s219 + $0x44] sm:$0xf]
      %v244 = vld [vmem:[%s219 + $0x48] sm:$0xf]
      %v245 = vld [vmem:[%s219 + $0x4c] sm:$0xf]
      %v246 = vld [vmem:[%s219 + $0x50] sm:$0xf]
      %v247 = vld [vmem:[%s219 + $0x54] sm:$0xf]
      %v248 = vld [vmem:[%s219 + $0x58] sm:$0xf]
      %v249 = vld [vmem:[%s219 + $0x5c] sm:$0xf]
      %v250 = vld [vmem:[%s219 + $0x60] sm:$0xf]
      %v251 = vld [vmem:[%s219 + $0x64] sm:$0xf]
      %v252 = vld [vmem:[%s219 + $0x68] sm:$0xf]
      %v253 = vld [vmem:[%s219 + $0x6c] sm:$0xf]
      %v254 = vld [vmem:[%s219 + $0x70] sm:$0xf]
      %v255 = vld [vmem:[%s219 + $0x74] sm:$0xf]
      %v256 = vld [vmem:[%s219 + $0x78] sm:$0xf]
      %v257 = vld [vmem:[%s219 + $0x7c] sm:$0xf]
      %v258 = vld [vmem:[%s219 + $0x80] sm:$0xf]
      %v259 = vld [vmem:[%s219 + $0x84] sm:$0xf]
      %v260 = vld [vmem:[%s219 + $0x88] sm:$0xf]
      %v261 = vld [vmem:[%s219 + $0x8c] sm:$0xf]
      %v262 = vld [vmem:[%s1] sm:$0xf]
      %v263 = vld [vmem:[%s1 + $0x4] sm:$0x3]
      %s264 = scalar_lea.vmem %s1, 8
      %v265 = vld [vmem:[%s264] sm:$0xf]
      %v266 = vld [vmem:[%s264 + $0x4] sm:$0x3]
      %v299 = vunpack.c.l.b16 %v228
      %v300 = vunpack.c.l.b16 %v229
      %v301 = vunpack.c.l.b16 %v230
      %v302 = vunpack.c.l.b16 %v231
      %v303 = vunpack.c.l.b16 %v232
      %v304 = vunpack.c.l.b16 %v233
      %v305 = vunpack.c.l.b16 %v234
      %v306 = vunpack.c.l.b16 %v235
      %v307 = vunpack.c.l.b16 %v236
      %v308 = vunpack.c.l.b16 %v237
      %v309 = vunpack.c.l.b16 %v238
      %v310 = vunpack.c.l.b16 %v239
      %v311 = vunpack.c.l.b16 %v240
      %v312 = vunpack.c.l.b16 %v241
      %v313 = vunpack.c.l.b16 %v242
      %v314 = vunpack.c.l.b16 %v243
      %v315 = vunpack.c.l.b16 %v244
      %v316 = vunpack.c.l.b16 %v245
      %v317 = vunpack.c.l.b16 %v246
      %v318 = vunpack.c.l.b16 %v247
      %v319 = vunpack.c.l.b16 %v248
      %v320 = vunpack.c.l.b16 %v249
      %v321 = vunpack.c.l.b16 %v250
      %v322 = vunpack.c.l.b16 %v251
      %v323 = vunpack.c.l.b16 %v252
      %v324 = vunpack.c.l.b16 %v253
      %v325 = vunpack.c.l.b16 %v254
      %v326 = vunpack.c.l.b16 %v255
      %v327 = vunpack.c.l.b16 %v256
      %v328 = vunpack.c.l.b16 %v257
      %v329 = vunpack.c.l.b16 %v258
      %v330 = vunpack.c.l.b16 %v259
      %v331 = vpack.c.b16 %v300, %v299
      %v332 = vpack.c.b16 %v302, %v301
      %v333 = vpack.c.b16 %v304, %v303
      %v334 = vpack.c.b16 %v306, %v305
      %v335 = vpack.c.b16 %v308, %v307
      %v336 = vpack.c.b16 %v310, %v309
      %v337 = vpack.c.b16 %v312, %v311
      %v338 = vpack.c.b16 %v314, %v313
      %v339 = vpack.c.b16 %v316, %v315
      %v340 = vpack.c.b16 %v318, %v317
      %v341 = vpack.c.b16 %v320, %v319
      %v342 = vpack.c.b16 %v322, %v321
      %v343 = vpack.c.b16 %v324, %v323
      %v344 = vpack.c.b16 %v326, %v325
      %v345 = vpack.c.b16 %v328, %v327
      %v346 = vpack.c.b16 %v330, %v329
      %v349 = vunpack.c.l.b16 %v265
      %v350 = vunpack.c.l.b16 %v266
      %v351 = vpack.c.b16 %v350, %v349
      %vm352 = vcmask 97280
      %v354 = vsel %vm352, %v331, 0
      %v357 = vsel %vm352, %v332, 0
      %v360 = vsel %vm352, %v333, 0
      %v363 = vsel %vm352, %v334, 0
      %v366 = vsel %vm352, %v335, 0
      %v369 = vsel %vm352, %v336, 0
      %v372 = vsel %vm352, %v337, 0
      %v375 = vsel %vm352, %v338, 0
      %v378 = vsel %vm352, %v339, 0
      %v381 = vsel %vm352, %v340, 0
      %v384 = vsel %vm352, %v341, 0
      %v387 = vsel %vm352, %v342, 0
      %v390 = vsel %vm352, %v343, 0
      %v393 = vsel %vm352, %v344, 0
      %v396 = vsel %vm352, %v345, 0
      %v399 = vsel %vm352, %v346, 0
      %vm401 = vcmask 1045504
      %v403 = vsel %vm401, %v351, 0
      %405 = vmatprep.subr.bf16.mxu0 0
      %406 = vmatpush1.bf16.msra.mxu0 %v403
      %407 = vmatprep.subr.bf16.mxu0 0
      %408 = vmatpush1.bf16.msra.mxu0 0
      %409 = vmatprep.subr.bf16.mxu0 0
      %410 = vmatpush1.bf16.msra.mxu0 0
      %411 = vmatprep.subr.bf16.mxu0 0
      %412 = vmatpush1.bf16.msra.mxu0 0
      %413 = vmatprep.subr.bf16.mxu0 0
      %414 = vmatpush1.bf16.msra.mxu0 0
      %415 = vmatprep.subr.bf16.mxu0 0
      %416 = vmatpush1.bf16.msra.mxu0 0
      %417 = vmatprep.subr.bf16.mxu0 0
      %418 = vmatpush1.bf16.msra.mxu0 0
      %419 = vmatprep.subr.bf16.mxu0 0
      %420 = vmatpush1.bf16.msra.mxu0 0
      %421 = vmatprep.subr.bf16.mxu0 0
      %422 = vmatpush1.bf16.msra.mxu0 0
      %423 = vmatprep.subr.bf16.mxu0 0
      %424 = vmatpush1.bf16.msra.mxu0 0
      %425 = vmatprep.subr.bf16.mxu0 0
      %426 = vmatpush1.bf16.msra.mxu0 0
      %427 = vmatprep.subr.bf16.mxu0 0
      %428 = vmatpush1.bf16.msra.mxu0 0
      %429 = vmatprep.subr.bf16.mxu0 0
      %430 = vmatpush1.bf16.msra.mxu0 0
      %431 = vmatprep.subr.bf16.mxu0 0
      %432 = vmatpush1.bf16.msra.mxu0 0
      %433 = vmatprep.subr.bf16.mxu0 0
      %434 = vmatpush1.bf16.msra.mxu0 0
      %435 = vmatprep.subr.bf16.mxu0 0
      %436 = vmatpush1.bf16.msra.mxu0 0
      %437 = vmatprep.mubr.bf16.mxu0 0
      %438 = vmatmul.mubr.bf16.gmra.mrb[0].mxu0 %v354
      %v439 = vpop.f32.mrb[0].mxu0
      %v440 = vadd.f32 0.0, %v439
      %v441 = vpop.f32.mrb[0].mxu0
      %v442 = vpop.f32.mrb[0].mxu0
      %v443 = vadd.f32 0.0, %v442
      %v444 = vpop.f32.mrb[0].mxu0
      %445 = vmatprep.mubr.bf16.mxu0 0
      %446 = vmatmul.mubr.bf16.gmra.mrb[0].mxu0 %v357
      %v447 = vpop.f32.mrb[0].mxu0
      %v448 = vadd.f32 0.0, %v447
      %v449 = vpop.f32.mrb[0].mxu0
      %v450 = vpop.f32.mrb[0].mxu0
      %v451 = vadd.f32 0.0, %v450
      %v452 = vpop.f32.mrb[0].mxu0
      %453 = vmatprep.mubr.bf16.mxu0 0
      %454 = vmatmul.mubr.bf16.gmra.mrb[0].mxu0 %v360
      %v455 = vpop.f32.mrb[0].mxu0
      %v456 = vadd.f32 0.0, %v455
      %v457 = vpop.f32.mrb[0].mxu0
      %v458 = vpop.f32.mrb[0].mxu0
      %v459 = vadd.f32 0.0, %v458
      %v460 = vpop.f32.mrb[0].mxu0
      %461 = vmatprep.mubr.bf16.mxu0 0
      %462 = vmatmul.mubr.bf16.gmra.mrb[0].mxu0 %v363
      %v463 = vpop.f32.mrb[0].mxu0
      %v464 = vadd.f32 0.0, %v463
      %v465 = vpop.f32.mrb[0].mxu0
      %v466 = vpop.f32.mrb[0].mxu0
      %v467 = vadd.f32 0.0, %v466
      %v468 = vpop.f32.mrb[0].mxu0
      %469 = vmatprep.mubr.bf16.mxu0 0
      %470 = vmatmul.mubr.bf16.gmra.mrb[0].mxu0 %v366
      %v471 = vpop.f32.mrb[0].mxu0
      %v472 = vadd.f32 0.0, %v471
      %v473 = vpop.f32.mrb[0].mxu0
      %v474 = vpop.f32.mrb[0].mxu0
      %v475 = vadd.f32 0.0, %v474
      %v476 = vpop.f32.mrb[0].mxu0
      %477 = vmatprep.mubr.bf16.mxu0 0
      %478 = vmatmul.mubr.bf16.gmra.mrb[0].mxu0 %v369
      %v479 = vpop.f32.mrb[0].mxu0
      %v480 = vadd.f32 0.0, %v479
      %v481 = vpop.f32.mrb[0].mxu0
      %v482 = vpop.f32.mrb[0].mxu0
      %v483 = vadd.f32 0.0, %v482
      %v484 = vpop.f32.mrb[0].mxu0
      %485 = vmatprep.mubr.bf16.mxu0 0
      %486 = vmatmul.mubr.bf16.gmra.mrb[0].mxu0 %v372
      %v487 = vpop.f32.mrb[0].mxu0
      %v488 = vadd.f32 0.0, %v487
      %v489 = vpop.f32.mrb[0].mxu0
      %v490 = vpop.f32.mrb[0].mxu0
      %v491 = vadd.f32 0.0, %v490
      %v492 = vpop.f32.mrb[0].mxu0
      %493 = vmatprep.mubr.bf16.mxu0 0
      %494 = vmatmul.mubr.bf16.gmra.mrb[0].mxu0 %v375
      %v495 = vpop.f32.mrb[0].mxu0
      %v496 = vadd.f32 0.0, %v495
      %v497 = vpop.f32.mrb[0].mxu0
      %v498 = vpop.f32.mrb[0].mxu0
      %v499 = vadd.f32 0.0, %v498
      %v500 = vpop.f32.mrb[0].mxu0
      %501 = vmatprep.mubr.bf16.mxu0 0
      %502 = vmatmul.mubr.bf16.gmra.mrb[0].mxu0 %v378
      %v503 = vpop.f32.mrb[0].mxu0
      %v504 = vadd.f32 0.0, %v503
      %v505 = vpop.f32.mrb[0].mxu0
      %v506 = vpop.f32.mrb[0].mxu0
      %v507 = vadd.f32 0.0, %v506
      %v508 = vpop.f32.mrb[0].mxu0
      %509 = vmatprep.mubr.bf16.mxu0 0
      %510 = vmatmul.mubr.bf16.gmra.mrb[0].mxu0 %v381
      %v511 = vpop.f32.mrb[0].mxu0
      %v512 = vadd.f32 0.0, %v511
      %v513 = vpop.f32.mrb[0].mxu0
      %v514 = vpop.f32.mrb[0].mxu0
      %v515 = vadd.f32 0.0, %v514
      %v516 = vpop.f32.mrb[0].mxu0
      %517 = vmatprep.mubr.bf16.mxu0 0
      %518 = vmatmul.mubr.bf16.gmra.mrb[0].mxu0 %v384
      %v519 = vpop.f32.mrb[0].mxu0
      %v520 = vadd.f32 0.0, %v519
      %v521 = vpop.f32.mrb[0].mxu0
      %v522 = vpop.f32.mrb[0].mxu0
      %v523 = vadd.f32 0.0, %v522
      %v524 = vpop.f32.mrb[0].mxu0
      %525 = vmatprep.mubr.bf16.mxu0 0
      %526 = vmatmul.mubr.bf16.gmra.mrb[0].mxu0 %v387
      %v527 = vpop.f32.mrb[0].mxu0
      %v528 = vadd.f32 0.0, %v527
      %v529 = vpop.f32.mrb[0].mxu0
      %v530 = vpop.f32.mrb[0].mxu0
      %v531 = vadd.f32 0.0, %v530
      %v532 = vpop.f32.mrb[0].mxu0
      %533 = vmatprep.mubr.bf16.mxu0 0
      %534 = vmatmul.mubr.bf16.gmra.mrb[0].mxu0 %v390
      %v535 = vpop.f32.mrb[0].mxu0
      %v536 = vadd.f32 0.0, %v535
      %v537 = vpop.f32.mrb[0].mxu0
      %v538 = vpop.f32.mrb[0].mxu0
      %v539 = vadd.f32 0.0, %v538
      %v540 = vpop.f32.mrb[0].mxu0
      %541 = vmatprep.mubr.bf16.mxu0 0
      %542 = vmatmul.mubr.bf16.gmra.mrb[0].mxu0 %v393
      %v543 = vpop.f32.mrb[0].mxu0
      %v544 = vadd.f32 0.0, %v543
      %v545 = vpop.f32.mrb[0].mxu0
      %v546 = vpop.f32.mrb[0].mxu0
      %v547 = vadd.f32 0.0, %v546
      %v548 = vpop.f32.mrb[0].mxu0
      %549 = vmatprep.mubr.bf16.mxu0 0
      %550 = vmatmul.mubr.bf16.gmra.mrb[0].mxu0 %v396
      %v551 = vpop.f32.mrb[0].mxu0
      %v552 = vadd.f32 0.0, %v551
      %v553 = vpop.f32.mrb[0].mxu0
      %v554 = vpop.f32.mrb[0].mxu0
      %v555 = vadd.f32 0.0, %v554
      %v556 = vpop.f32.mrb[0].mxu0
      %557 = vmatprep.mubr.bf16.mxu0 0
      %558 = vmatmul.mubr.bf16.gmra.mrb[0].mxu0 %v399
      %v559 = vpop.f32.mrb[0].mxu0
      %v560 = vadd.f32 0.0, %v559
      %v561 = vpop.f32.mrb[0].mxu0
      %v562 = vpop.f32.mrb[0].mxu0
      %v563 = vadd.f32 0.0, %v562
      %v564 = vpop.f32.mrb[0].mxu0
      %565 = vdwg.mxu0
      %v568 = vunpack.c.l.b16 %v226
      %v569 = vunpack.c.l.b16 %v227
      %v570 = vpack.c.b16 %v569, %v568
      %v573 = vunpack.c.l.b16 %v262
      %v574 = vunpack.c.l.b16 %v263
      %v575 = vpack.c.b16 %v574, %v573
      %v577 = vsel %vm352, %v570, 0
      %v580 = vsel %vm401, %v575, 0
      %582 = vmatprep.subr.bf16.mxu0 0
      %583 = vmatpush1.bf16.msra.mxu0 %v580
      %584 = vmatprep.subr.bf16.mxu0 0
      %585 = vmatpush1.bf16.msra.mxu0 0
      %586 = vmatprep.subr.bf16.mxu0 0
      %587 = vmatpush1.bf16.msra.mxu0 0
      %588 = vmatprep.subr.bf16.mxu0 0
      %589 = vmatpush1.bf16.msra.mxu0 0
      %590 = vmatprep.subr.bf16.mxu0 0
      %591 = vmatpush1.bf16.msra.mxu0 0
      %592 = vmatprep.subr.bf16.mxu0 0
      %593 = vmatpush1.bf16.msra.mxu0 0
      %594 = vmatprep.subr.bf16.mxu0 0
      %595 = vmatpush1.bf16.msra.mxu0 0
      %596 = vmatprep.subr.bf16.mxu0 0
      %597 = vmatpush1.bf16.msra.mxu0 0
      %598 = vmatprep.subr.bf16.mxu0 0
      %599 = vmatpush1.bf16.msra.mxu0 0
      %600 = vmatprep.subr.bf16.mxu0 0
      %601 = vmatpush1.bf16.msra.mxu0 0
      %602 = vmatprep.subr.bf16.mxu0 0
      %603 = vmatpush1.bf16.msra.mxu0 0
      %604 = vmatprep.subr.bf16.mxu0 0
      %605 = vmatpush1.bf16.msra.mxu0 0
      %606 = vmatprep.subr.bf16.mxu0 0
      %607 = vmatpush1.bf16.msra.mxu0 0
      %608 = vmatprep.subr.bf16.mxu0 0
      %609 = vmatpush1.bf16.msra.mxu0 0
      %610 = vmatprep.subr.bf16.mxu0 0
      %611 = vmatpush1.bf16.msra.mxu0 0
      %612 = vmatprep.subr.bf16.mxu0 0
      %613 = vmatpush1.bf16.msra.mxu0 0
      %614 = vmatprep.mubr.bf16.mxu0 0
      %615 = vmatmul.mubr.bf16.gmra.mrb[0].mxu0 %v577
      %v616 = vpop.f32.mrb[0].mxu0
      %v617 = vadd.f32 %v440, %v616
      %v618 = vpop.f32.mrb[0].mxu0
      %v619 = vpop.f32.mrb[0].mxu0
      %v620 = vadd.f32 %v443, %v619
      %v621 = vpop.f32.mrb[0].mxu0
      %622 = vmatprep.mubr.bf16.mxu0 0
      %623 = vmatmul.mubr.bf16.gmra.mrb[0].mxu0 %v354
      %v624 = vpop.f32.mrb[0].mxu0
      %v625 = vadd.f32 %v448, %v624
      %v626 = vpop.f32.mrb[0].mxu0
      %v627 = vpop.f32.mrb[0].mxu0
      %v628 = vadd.f32 %v451, %v627
      %v629 = vpop.f32.mrb[0].mxu0
      %630 = vmatprep.mubr.bf16.mxu0 0
      %631 = vmatmul.mubr.bf16.gmra.mrb[0].mxu0 %v357
      %v632 = vpop.f32.mrb[0].mxu0
      %v633 = vadd.f32 %v456, %v632
      %v634 = vpop.f32.mrb[0].mxu0
      %v635 = vpop.f32.mrb[0].mxu0
      %v636 = vadd.f32 %v459, %v635
      %v637 = vpop.f32.mrb[0].mxu0
      %638 = vmatprep.mubr.bf16.mxu0 0
      %639 = vmatmul.mubr.bf16.gmra.mrb[0].mxu0 %v360
      %v640 = vpop.f32.mrb[0].mxu0
      %v641 = vadd.f32 %v464, %v640
      %v642 = vpop.f32.mrb[0].mxu0
      %v643 = vpop.f32.mrb[0].mxu0
      %v644 = vadd.f32 %v467, %v643
      %v645 = vpop.f32.mrb[0].mxu0
      %646 = vmatprep.mubr.bf16.mxu0 0
      %647 = vmatmul.mubr.bf16.gmra.mrb[0].mxu0 %v363
      %v648 = vpop.f32.mrb[0].mxu0
      %v649 = vadd.f32 %v472, %v648
      %v650 = vpop.f32.mrb[0].mxu0
      %v651 = vpop.f32.mrb[0].mxu0
      %v652 = vadd.f32 %v475, %v651
      %v653 = vpop.f32.mrb[0].mxu0
      %654 = vmatprep.mubr.bf16.mxu0 0
      %655 = vmatmul.mubr.bf16.gmra.mrb[0].mxu0 %v366
      %v656 = vpop.f32.mrb[0].mxu0
      %v657 = vadd.f32 %v480, %v656
      %v658 = vpop.f32.mrb[0].mxu0
      %v659 = vpop.f32.mrb[0].mxu0
      %v660 = vadd.f32 %v483, %v659
      %v661 = vpop.f32.mrb[0].mxu0
      %662 = vmatprep.mubr.bf16.mxu0 0
      %663 = vmatmul.mubr.bf16.gmra.mrb[0].mxu0 %v369
      %v664 = vpop.f32.mrb[0].mxu0
      %v665 = vadd.f32 %v488, %v664
      %v666 = vpop.f32.mrb[0].mxu0
      %v667 = vpop.f32.mrb[0].mxu0
      %v668 = vadd.f32 %v491, %v667
      %v669 = vpop.f32.mrb[0].mxu0
      %670 = vmatprep.mubr.bf16.mxu0 0
      %671 = vmatmul.mubr.bf16.gmra.mrb[0].mxu0 %v372
      %v672 = vpop.f32.mrb[0].mxu0
      %v673 = vadd.f32 %v496, %v672
      %v674 = vpop.f32.mrb[0].mxu0
      %v675 = vpop.f32.mrb[0].mxu0
      %v676 = vadd.f32 %v499, %v675
      %v677 = vpop.f32.mrb[0].mxu0
      %678 = vmatprep.mubr.bf16.mxu0 0
      %679 = vmatmul.mubr.bf16.gmra.mrb[0].mxu0 %v375
      %v680 = vpop.f32.mrb[0].mxu0
      %v681 = vadd.f32 %v504, %v680
      %v682 = vpop.f32.mrb[0].mxu0
      %v683 = vpop.f32.mrb[0].mxu0
      %v684 = vadd.f32 %v507, %v683
      %v685 = vpop.f32.mrb[0].mxu0
      %686 = vmatprep.mubr.bf16.mxu0 0
      %687 = vmatmul.mubr.bf16.gmra.mrb[0].mxu0 %v378
      %v688 = vpop.f32.mrb[0].mxu0
      %v689 = vadd.f32 %v512, %v688
      %v690 = vpop.f32.mrb[0].mxu0
      %v691 = vpop.f32.mrb[0].mxu0
      %v692 = vadd.f32 %v515, %v691
      %v693 = vpop.f32.mrb[0].mxu0
      %694 = vmatprep.mubr.bf16.mxu0 0
      %695 = vmatmul.mubr.bf16.gmra.mrb[0].mxu0 %v381
      %v696 = vpop.f32.mrb[0].mxu0
      %v697 = vadd.f32 %v520, %v696
      %v698 = vpop.f32.mrb[0].mxu0
      %v699 = vpop.f32.mrb[0].mxu0
      %v700 = vadd.f32 %v523, %v699
      %v701 = vpop.f32.mrb[0].mxu0
      %702 = vmatprep.mubr.bf16.mxu0 0
      %703 = vmatmul.mubr.bf16.gmra.mrb[0].mxu0 %v384
      %v704 = vpop.f32.mrb[0].mxu0
      %v705 = vadd.f32 %v528, %v704
      %v706 = vpop.f32.mrb[0].mxu0
      %v707 = vpop.f32.mrb[0].mxu0
      %v708 = vadd.f32 %v531, %v707
      %v709 = vpop.f32.mrb[0].mxu0
      %710 = vmatprep.mubr.bf16.mxu0 0
      %711 = vmatmul.mubr.bf16.gmra.mrb[0].mxu0 %v387
      %v712 = vpop.f32.mrb[0].mxu0
      %v713 = vadd.f32 %v536, %v712
      %v714 = vpop.f32.mrb[0].mxu0
      %v715 = vpop.f32.mrb[0].mxu0
      %v716 = vadd.f32 %v539, %v715
      %v717 = vpop.f32.mrb[0].mxu0
      %718 = vmatprep.mubr.bf16.mxu0 0
      %719 = vmatmul.mubr.bf16.gmra.mrb[0].mxu0 %v390
      %v720 = vpop.f32.mrb[0].mxu0
      %v721 = vadd.f32 %v544, %v720
      %v722 = vpop.f32.mrb[0].mxu0
      %v723 = vpop.f32.mrb[0].mxu0
      %v724 = vadd.f32 %v547, %v723
      %v725 = vpop.f32.mrb[0].mxu0
      %726 = vmatprep.mubr.bf16.mxu0 0
      %727 = vmatmul.mubr.bf16.gmra.mrb[0].mxu0 %v393
      %v728 = vpop.f32.mrb[0].mxu0
      %v729 = vadd.f32 %v552, %v728
      %v730 = vpop.f32.mrb[0].mxu0
      %v731 = vpop.f32.mrb[0].mxu0
      %v732 = vadd.f32 %v555, %v731
      %v733 = vpop.f32.mrb[0].mxu0
      %734 = vmatprep.mubr.bf16.mxu0 0
      %735 = vmatmul.mubr.bf16.gmra.mrb[0].mxu0 %v396
      %v736 = vpop.f32.mrb[0].mxu0
      %v737 = vadd.f32 %v560, %v736
      %v738 = vpop.f32.mrb[0].mxu0
      %v739 = vpop.f32.mrb[0].mxu0
      %v740 = vadd.f32 %v563, %v739
      %v741 = vpop.f32.mrb[0].mxu0
      %742 = vdwg.mxu0
      %s743 = scalar_lea.vmem %s1, 16
      %v744 = vld [vmem:[%s743] sm:$0xf]
      %v745 = vld [vmem:[%s743 + $0x4] sm:$0x3]
      %v748 = vunpack.c.l.b16 %v260
      %v749 = vunpack.c.l.b16 %v261
      %v750 = vpack.c.b16 %v749, %v748
      %v753 = vunpack.c.l.b16 %v744
      %v754 = vunpack.c.l.b16 %v745
      %v755 = vpack.c.b16 %v754, %v753
      %v757 = vsel %vm352, %v750, 0
      %v760 = vsel %vm401, %v755, 0
      %762 = vmatprep.subr.bf16.mxu0 0
      %763 = vmatpush1.bf16.msra.mxu0 %v760
      %764 = vmatprep.subr.bf16.mxu0 0
      %765 = vmatpush1.bf16.msra.mxu0 0
      %766 = vmatprep.subr.bf16.mxu0 0
      %767 = vmatpush1.bf16.msra.mxu0 0
      %768 = vmatprep.subr.bf16.mxu0 0
      %769 = vmatpush1.bf16.msra.mxu0 0
      %770 = vmatprep.subr.bf16.mxu0 0
      %771 = vmatpush1.bf16.msra.mxu0 0
      %772 = vmatprep.subr.bf16.mxu0 0
      %773 = vmatpush1.bf16.msra.mxu0 0
      %774 = vmatprep.subr.bf16.mxu0 0
      %775 = vmatpush1.bf16.msra.mxu0 0
      %776 = vmatprep.subr.bf16.mxu0 0
      %777 = vmatpush1.bf16.msra.mxu0 0
      %778 = vmatprep.subr.bf16.mxu0 0
      %779 = vmatpush1.bf16.msra.mxu0 0
      %780 = vmatprep.subr.bf16.mxu0 0
      %781 = vmatpush1.bf16.msra.mxu0 0
      %782 = vmatprep.subr.bf16.mxu0 0
      %783 = vmatpush1.bf16.msra.mxu0 0
      %784 = vmatprep.subr.bf16.mxu0 0
      %785 = vmatpush1.bf16.msra.mxu0 0
      %786 = vmatprep.subr.bf16.mxu0 0
      %787 = vmatpush1.bf16.msra.mxu0 0
      %788 = vmatprep.subr.bf16.mxu0 0
      %789 = vmatpush1.bf16.msra.mxu0 0
      %790 = vmatprep.subr.bf16.mxu0 0
      %791 = vmatpush1.bf16.msra.mxu0 0
      %792 = vmatprep.subr.bf16.mxu0 0
      %793 = vmatpush1.bf16.msra.mxu0 0
      %794 = vmatprep.mubr.bf16.mxu0 0
      %795 = vmatmul.mubr.bf16.gmra.mrb[0].mxu0 %v357
      %v796 = vpop.f32.mrb[0].mxu0
      %v797 = vadd.f32 0.0, %v796
      %v798 = vpop.f32.mrb[0].mxu0
      %v799 = vpop.f32.mrb[0].mxu0
      %v800 = vadd.f32 0.0, %v799
      %v801 = vpop.f32.mrb[0].mxu0
      %802 = vmatprep.mubr.bf16.mxu0 0
      %803 = vmatmul.mubr.bf16.gmra.mrb[0].mxu0 %v360
      %v804 = vpop.f32.mrb[0].mxu0
      %v805 = vadd.f32 0.0, %v804
      %v806 = vpop.f32.mrb[0].mxu0
      %v807 = vpop.f32.mrb[0].mxu0
      %v808 = vadd.f32 0.0, %v807
      %v809 = vpop.f32.mrb[0].mxu0
      %810 = vmatprep.mubr.bf16.mxu0 0
      %811 = vmatmul.mubr.bf16.gmra.mrb[0].mxu0 %v363
      %v812 = vpop.f32.mrb[0].mxu0
      %v813 = vadd.f32 0.0, %v812
      %v814 = vpop.f32.mrb[0].mxu0
      %v815 = vpop.f32.mrb[0].mxu0
      %v816 = vadd.f32 0.0, %v815
      %v817 = vpop.f32.mrb[0].mxu0
      %818 = vmatprep.mubr.bf16.mxu0 0
      %819 = vmatmul.mubr.bf16.gmra.mrb[0].mxu0 %v366
      %v820 = vpop.f32.mrb[0].mxu0
      %v821 = vadd.f32 0.0, %v820
      %v822 = vpop.f32.mrb[0].mxu0
      %v823 = vpop.f32.mrb[0].mxu0
      %v824 = vadd.f32 0.0, %v823
      %v825 = vpop.f32.mrb[0].mxu0
      %826 = vmatprep.mubr.bf16.mxu0 0
      %827 = vmatmul.mubr.bf16.gmra.mrb[0].mxu0 %v369
      %v828 = vpop.f32.mrb[0].mxu0
      %v829 = vadd.f32 0.0, %v828
      %v830 = vpop.f32.mrb[0].mxu0
      %v831 = vpop.f32.mrb[0].mxu0
      %v832 = vadd.f32 0.0, %v831
      %v833 = vpop.f32.mrb[0].mxu0
      %834 = vmatprep.mubr.bf16.mxu0 0
      %835 = vmatmul.mubr.bf16.gmra.mrb[0].mxu0 %v372
      %v836 = vpop.f32.mrb[0].mxu0
      %v837 = vadd.f32 0.0, %v836
      %v838 = vpop.f32.mrb[0].mxu0
      %v839 = vpop.f32.mrb[0].mxu0
      %v840 = vadd.f32 0.0, %v839
      %v841 = vpop.f32.mrb[0].mxu0
      %842 = vmatprep.mubr.bf16.mxu0 0
      %843 = vmatmul.mubr.bf16.gmra.mrb[0].mxu0 %v375
      %v844 = vpop.f32.mrb[0].mxu0
      %v845 = vadd.f32 0.0, %v844
      %v846 = vpop.f32.mrb[0].mxu0
      %v847 = vpop.f32.mrb[0].mxu0
      %v848 = vadd.f32 0.0, %v847
      %v849 = vpop.f32.mrb[0].mxu0
      %850 = vmatprep.mubr.bf16.mxu0 0
      %851 = vmatmul.mubr.bf16.gmra.mrb[0].mxu0 %v378
      %v852 = vpop.f32.mrb[0].mxu0
      %v853 = vadd.f32 0.0, %v852
      %v854 = vpop.f32.mrb[0].mxu0
      %v855 = vpop.f32.mrb[0].mxu0
      %v856 = vadd.f32 0.0, %v855
      %v857 = vpop.f32.mrb[0].mxu0
      %858 = vmatprep.mubr.bf16.mxu0 0
      %859 = vmatmul.mubr.bf16.gmra.mrb[0].mxu0 %v381
      %v860 = vpop.f32.mrb[0].mxu0
      %v861 = vadd.f32 0.0, %v860
      %v862 = vpop.f32.mrb[0].mxu0
      %v863 = vpop.f32.mrb[0].mxu0
      %v864 = vadd.f32 0.0, %v863
      %v865 = vpop.f32.mrb[0].mxu0
      %866 = vmatprep.mubr.bf16.mxu0 0
      %867 = vmatmul.mubr.bf16.gmra.mrb[0].mxu0 %v384
      %v868 = vpop.f32.mrb[0].mxu0
      %v869 = vadd.f32 0.0, %v868
      %v870 = vpop.f32.mrb[0].mxu0
      %v871 = vpop.f32.mrb[0].mxu0
      %v872 = vadd.f32 0.0, %v871
      %v873 = vpop.f32.mrb[0].mxu0
      %874 = vmatprep.mubr.bf16.mxu0 0
      %875 = vmatmul.mubr.bf16.gmra.mrb[0].mxu0 %v387
      %v876 = vpop.f32.mrb[0].mxu0
      %v877 = vadd.f32 0.0, %v876
      %v878 = vpop.f32.mrb[0].mxu0
      %v879 = vpop.f32.mrb[0].mxu0
      %v880 = vadd.f32 0.0, %v879
      %v881 = vpop.f32.mrb[0].mxu0
      %882 = vmatprep.mubr.bf16.mxu0 0
      %883 = vmatmul.mubr.bf16.gmra.mrb[0].mxu0 %v390
      %v884 = vpop.f32.mrb[0].mxu0
      %v885 = vadd.f32 0.0, %v884
      %v886 = vpop.f32.mrb[0].mxu0
      %v887 = vpop.f32.mrb[0].mxu0
      %v888 = vadd.f32 0.0, %v887
      %v889 = vpop.f32.mrb[0].mxu0
      %890 = vmatprep.mubr.bf16.mxu0 0
      %891 = vmatmul.mubr.bf16.gmra.mrb[0].mxu0 %v393
      %v892 = vpop.f32.mrb[0].mxu0
      %v893 = vadd.f32 0.0, %v892
      %v894 = vpop.f32.mrb[0].mxu0
      %v895 = vpop.f32.mrb[0].mxu0
      %v896 = vadd.f32 0.0, %v895
      %v897 = vpop.f32.mrb[0].mxu0
      %898 = vmatprep.mubr.bf16.mxu0 0
      %899 = vmatmul.mubr.bf16.gmra.mrb[0].mxu0 %v396
      %v900 = vpop.f32.mrb[0].mxu0
      %v901 = vadd.f32 0.0, %v900
      %v902 = vpop.f32.mrb[0].mxu0
      %v903 = vpop.f32.mrb[0].mxu0
      %v904 = vadd.f32 0.0, %v903
      %v905 = vpop.f32.mrb[0].mxu0
      %906 = vmatprep.mubr.bf16.mxu0 0
      %907 = vmatmul.mubr.bf16.gmra.mrb[0].mxu0 %v399
      %v908 = vpop.f32.mrb[0].mxu0
      %v909 = vadd.f32 0.0, %v908
      %v910 = vpop.f32.mrb[0].mxu0
      %v911 = vpop.f32.mrb[0].mxu0
      %v912 = vadd.f32 0.0, %v911
      %v913 = vpop.f32.mrb[0].mxu0
      %914 = vmatprep.mubr.bf16.mxu0 0
      %915 = vmatmul.mubr.bf16.gmra.mrb[0].mxu0 %v757
      %v916 = vpop.f32.mrb[0].mxu0
      %v917 = vadd.f32 0.0, %v916
      %v918 = vpop.f32.mrb[0].mxu0
      %v919 = vpop.f32.mrb[0].mxu0
      %v920 = vadd.f32 0.0, %v919
      %v921 = vpop.f32.mrb[0].mxu0
      %922 = vdwg.mxu0
      %v923 = vadd.f32 %v617, %v797
      %v924 = vadd.f32 %v620, %v800
      %v925 = vadd.f32 %v625, %v805
      %v926 = vadd.f32 %v628, %v808
      %v927 = vadd.f32 %v633, %v813
      %v928 = vadd.f32 %v636, %v816
      %v929 = vadd.f32 %v641, %v821
      %v930 = vadd.f32 %v644, %v824
      %v931 = vadd.f32 %v649, %v829
      %v932 = vadd.f32 %v652, %v832
      %v933 = vadd.f32 %v657, %v837
      %v934 = vadd.f32 %v660, %v840
      %v935 = vadd.f32 %v665, %v845
      %v936 = vadd.f32 %v668, %v848
      %v937 = vadd.f32 %v673, %v853
      %v938 = vadd.f32 %v676, %v856
      %v939 = vadd.f32 %v681, %v861
      %v940 = vadd.f32 %v684, %v864
      %v941 = vadd.f32 %v689, %v869
      %v942 = vadd.f32 %v692, %v872
      %v943 = vadd.f32 %v697, %v877
      %v944 = vadd.f32 %v700, %v880
      %v945 = vadd.f32 %v705, %v885
      %v946 = vadd.f32 %v708, %v888
      %v947 = vadd.f32 %v713, %v893
      %v948 = vadd.f32 %v716, %v896
      %v949 = vadd.f32 %v721, %v901
      %v950 = vadd.f32 %v724, %v904
      %v951 = vadd.f32 %v729, %v909
      %v952 = vadd.f32 %v732, %v912
      %v953 = vadd.f32 %v737, %v917
      %v954 = vadd.f32 %v740, %v920
      %v955 = vld [vmem:[%s2] sm:$0x1]
      %v957 = vlaneseq
      %v958 = vshrl.u32 %v957, 7
      %v959 = vsub.s32 0, %v958
      %v960 = vrot.slane %v955, %v959
      %v962 = vadd.f32 %v923, %v960
      %v963 = vadd.f32 %v924, %v960
      %v964 = vadd.f32 %v925, %v960
      %v965 = vadd.f32 %v926, %v960
      %v966 = vadd.f32 %v927, %v960
      %v967 = vadd.f32 %v928, %v960
      %v968 = vadd.f32 %v929, %v960
      %v969 = vadd.f32 %v930, %v960
      %v970 = vadd.f32 %v931, %v960
      %v971 = vadd.f32 %v932, %v960
      %v972 = vadd.f32 %v933, %v960
      %v973 = vadd.f32 %v934, %v960
      %v974 = vadd.f32 %v935, %v960
      %v975 = vadd.f32 %v936, %v960
      %v976 = vadd.f32 %v937, %v960
      %v977 = vadd.f32 %v938, %v960
      %v978 = vadd.f32 %v939, %v960
      %v979 = vadd.f32 %v940, %v960
      %v980 = vadd.f32 %v941, %v960
      %v981 = vadd.f32 %v942, %v960
      %v982 = vadd.f32 %v943, %v960
      %v983 = vadd.f32 %v944, %v960
      %v984 = vadd.f32 %v945, %v960
      %v985 = vadd.f32 %v946, %v960
      %v986 = vadd.f32 %v947, %v960
      %v987 = vadd.f32 %v948, %v960
      %v988 = vadd.f32 %v949, %v960
      %v989 = vadd.f32 %v950, %v960
      %v990 = vadd.f32 %v951, %v960
      %v991 = vadd.f32 %v952, %v960
      %v992 = vadd.f32 %v953, %v960
      %v993 = vadd.f32 %v954, %v960
      %v994 = vmax.f32 %v962, 0.0
      %v995 = vmax.f32 %v963, 0.0
      %v996 = vmax.f32 %v964, 0.0
      %v997 = vmax.f32 %v965, 0.0
      %v998 = vmax.f32 %v966, 0.0
      %v999 = vmax.f32 %v967, 0.0
      %v1000 = vmax.f32 %v968, 0.0
      %v1001 = vmax.f32 %v969, 0.0
      %v1002 = vmax.f32 %v970, 0.0
      %v1003 = vmax.f32 %v971, 0.0
      %v1004 = vmax.f32 %v972, 0.0
      %v1005 = vmax.f32 %v973, 0.0
      %v1006 = vmax.f32 %v974, 0.0
      %v1007 = vmax.f32 %v975, 0.0
      %v1008 = vmax.f32 %v976, 0.0
      %v1009 = vmax.f32 %v977, 0.0
      %v1010 = vmax.f32 %v978, 0.0
      %v1011 = vmax.f32 %v979, 0.0
      %v1012 = vmax.f32 %v980, 0.0
      %v1013 = vmax.f32 %v981, 0.0
      %v1014 = vmax.f32 %v982, 0.0
      %v1015 = vmax.f32 %v983, 0.0
      %v1016 = vmax.f32 %v984, 0.0
      %v1017 = vmax.f32 %v985, 0.0
      %v1018 = vmax.f32 %v986, 0.0
      %v1019 = vmax.f32 %v987, 0.0
      %v1020 = vmax.f32 %v988, 0.0
      %v1021 = vmax.f32 %v989, 0.0
      %v1022 = vmax.f32 %v990, 0.0
      %v1023 = vmax.f32 %v991, 0.0
      %v1024 = vmax.f32 %v992, 0.0
      %v1025 = vmax.f32 %v993, 0.0
      %v1026 = vlaneseq
      %v1027 = vshrl.u32 %v1026, 7
      %vm1028 = vcmp.eq.s32.totalorder %v1027, 0
      %v1029 = vsel %vm1028, 0.00390625, 0.0
      %v1030 = vpack.c.bf16 %v1029, %v1029
      %v1031 = vpack.c.bf16 %v995, %v994
      %v1032 = vpack.c.bf16 %v997, %v996
      %v1033 = vpack.c.bf16 %v999, %v998
      %v1034 = vpack.c.bf16 %v1001, %v1000
      %v1035 = vpack.c.bf16 %v1003, %v1002
      %v1036 = vpack.c.bf16 %v1005, %v1004
      %v1037 = vpack.c.bf16 %v1007, %v1006
      %v1038 = vpack.c.bf16 %v1009, %v1008
      %v1039 = vpack.c.bf16 %v1011, %v1010
      %v1040 = vpack.c.bf16 %v1013, %v1012
      %v1041 = vpack.c.bf16 %v1015, %v1014
      %v1042 = vpack.c.bf16 %v1017, %v1016
      %v1043 = vpack.c.bf16 %v1019, %v1018
      %v1044 = vpack.c.bf16 %v1021, %v1020
      %v1045 = vpack.c.bf16 %v1023, %v1022
      %v1046 = vpack.c.bf16 %v1025, %v1024
      %1047 = vmatprep.subr.bf16.mxu0 0
      %1048 = vmatpush1.bf16.msra.mxu0 %v1031
      %1049 = vmatprep.subr.bf16.mxu0 0
      %1050 = vmatpush1.bf16.msra.mxu0 %v1032
      %1051 = vmatprep.subr.bf16.mxu0 0
      %1052 = vmatpush1.bf16.msra.mxu0 %v1033
      %1053 = vmatprep.subr.bf16.mxu0 0
      %1054 = vmatpush1.bf16.msra.mxu0 %v1034
      %1055 = vmatprep.subr.bf16.mxu0 0
      %1056 = vmatpush1.bf16.msra.mxu0 %v1035
      %1057 = vmatprep.subr.bf16.mxu0 0
      %1058 = vmatpush1.bf16.msra.mxu0 %v1036
      %1059 = vmatprep.subr.bf16.mxu0 0
      %1060 = vmatpush1.bf16.msra.mxu0 %v1037
      %1061 = vmatprep.subr.bf16.mxu0 0
      %1062 = vmatpush1.bf16.msra.mxu0 %v1038
      %1063 = vmatprep.subr.bf16.mxu0 0
      %1064 = vmatpush1.bf16.msra.mxu0 %v1039
      %1065 = vmatprep.subr.bf16.mxu0 0
      %1066 = vmatpush1.bf16.msra.mxu0 %v1040
      %1067 = vmatprep.subr.bf16.mxu0 0
      %1068 = vmatpush1.bf16.msra.mxu0 %v1041
      %1069 = vmatprep.subr.bf16.mxu0 0
      %1070 = vmatpush1.bf16.msra.mxu0 %v1042
      %1071 = vmatprep.subr.bf16.mxu0 0
      %1072 = vmatpush1.bf16.msra.mxu0 %v1043
      %1073 = vmatprep.subr.bf16.mxu0 0
      %1074 = vmatpush1.bf16.msra.mxu0 %v1044
      %1075 = vmatprep.subr.bf16.mxu0 0
      %1076 = vmatpush1.bf16.msra.mxu0 %v1045
      %1077 = vmatprep.subr.bf16.mxu0 0
      %1078 = vmatpush1.bf16.msra.mxu0 %v1046
      %1079 = vmatprep.mubr.bf16.mxu0 %v1030
      %1080 = vmatmul.mubr.bf16.gmra.mrb[0].mxu0 %v1030
      %v1081 = vpop.f32.mrb[0].mxu0
      %v1082 = vadd.f32 0.0, %v1081
      %v1083 = vpop.f32.mrb[0].mxu0
      %v1084 = vpop.f32.mrb[0].mxu0
      %v1085 = vpop.f32.mrb[0].mxu0
      %1086 = vdwg.mxu0
      %v1087 = vpack.c.bf16 %v1082, %v1082
      %v1088 = vld [vmem:[%s3] sm:$0xf]
      %v1089 = vld [vmem:[%s3 + $0x4] sm:$0xf]
      %v1090 = vld [vmem:[%s3 + $0x8] sm:$0xf]
      %v1091 = vld [vmem:[%s3 + $0xc] sm:$0xf]
      %v1092 = vld [vmem:[%s3 + $0x10] sm:$0xf]
      %v1093 = vld [vmem:[%s3 + $0x14] sm:$0xf]
      %v1094 = vld [vmem:[%s3 + $0x18] sm:$0xf]
      %v1095 = vld [vmem:[%s3 + $0x1c] sm:$0xf]
      %v1096 = vld [vmem:[%s3 + $0x20] sm:$0xf]
      %v1097 = vld [vmem:[%s3 + $0x24] sm:$0xf]
      %v1098 = vld [vmem:[%s3 + $0x28] sm:$0xf]
      %v1099 = vld [vmem:[%s3 + $0x2c] sm:$0xf]
      %v1100 = vld [vmem:[%s3 + $0x30] sm:$0xf]
      %v1101 = vld [vmem:[%s3 + $0x34] sm:$0xf]
      %v1102 = vld [vmem:[%s3 + $0x38] sm:$0xf]
      %v1103 = vld [vmem:[%s3 + $0x3c] sm:$0xf]
      %v1104 = vld [vmem:[%s4] sm:$0x1]
      %v1106 = vlaneseq
      %v1107 = vshrl.u32 %v1106, 7
      %v1108 = vsub.s32 0, %v1107
      %v1109 = vrot.slane %v1104, %v1108
      %v1127 = vunpack.c.l.b16 %v1088
      %v1128 = vunpack.c.l.b16 %v1089
      %v1129 = vunpack.c.l.b16 %v1090
      %v1130 = vunpack.c.l.b16 %v1091
      %v1131 = vunpack.c.l.b16 %v1092
      %v1132 = vunpack.c.l.b16 %v1093
      %v1133 = vunpack.c.l.b16 %v1094
      %v1134 = vunpack.c.l.b16 %v1095
      %v1135 = vunpack.c.l.b16 %v1096
      %v1136 = vunpack.c.l.b16 %v1097
      %v1137 = vunpack.c.l.b16 %v1098
      %v1138 = vunpack.c.l.b16 %v1099
      %v1139 = vunpack.c.l.b16 %v1100
      %v1140 = vunpack.c.l.b16 %v1101
      %v1141 = vunpack.c.l.b16 %v1102
      %v1142 = vunpack.c.l.b16 %v1103
      %v1143 = vpack.c.b16 %v1128, %v1127
      %v1144 = vpack.c.b16 %v1130, %v1129
      %v1145 = vpack.c.b16 %v1132, %v1131
      %v1146 = vpack.c.b16 %v1134, %v1133
      %v1147 = vpack.c.b16 %v1136, %v1135
      %v1148 = vpack.c.b16 %v1138, %v1137
      %v1149 = vpack.c.b16 %v1140, %v1139
      %v1150 = vpack.c.b16 %v1142, %v1141
      %1159 = vmatprep.subr.bf16.mxu0 0
      %1160 = vmatpush1.bf16.msra.mxu0 %v1143
      %1161 = vmatprep.subr.bf16.mxu0 0
      %1162 = vmatpush1.bf16.msra.mxu0 %v1144
      %1163 = vmatprep.subr.bf16.mxu0 0
      %1164 = vmatpush1.bf16.msra.mxu0 %v1145
      %1165 = vmatprep.subr.bf16.mxu0 0
      %1166 = vmatpush1.bf16.msra.mxu0 %v1146
      %1167 = vmatprep.subr.bf16.mxu0 0
      %1168 = vmatpush1.bf16.msra.mxu0 %v1147
      %1169 = vmatprep.subr.bf16.mxu0 0
      %1170 = vmatpush1.bf16.msra.mxu0 %v1148
      %1171 = vmatprep.subr.bf16.mxu0 0
      %1172 = vmatpush1.bf16.msra.mxu0 %v1149
      %1173 = vmatprep.subr.bf16.mxu0 0
      %1174 = vmatpush1.bf16.msra.mxu0 %v1150
      %1175 = vmatprep.subr.bf16.mxu0 0
      %1176 = vmatpush1.bf16.msra.mxu0 0
      %1177 = vmatprep.subr.bf16.mxu0 0
      %1178 = vmatpush1.bf16.msra.mxu0 0
      %1179 = vmatprep.subr.bf16.mxu0 0
      %1180 = vmatpush1.bf16.msra.mxu0 0
      %1181 = vmatprep.subr.bf16.mxu0 0
      %1182 = vmatpush1.bf16.msra.mxu0 0
      %1183 = vmatprep.subr.bf16.mxu0 0
      %1184 = vmatpush1.bf16.msra.mxu0 0
      %1185 = vmatprep.subr.bf16.mxu0 0
      %1186 = vmatpush1.bf16.msra.mxu0 0
      %1187 = vmatprep.subr.bf16.mxu0 0
      %1188 = vmatpush1.bf16.msra.mxu0 0
      %1189 = vmatprep.subr.bf16.mxu0 0
      %1190 = vmatpush1.bf16.msra.mxu0 0
      %1191 = vmatprep.mubr.bf16.mxu0 0
      %1192 = vmatmul.mubr.bf16.gmra.mrb[0].mxu0 %v1087
      %v1193 = vpop.f32.mrb[0].mxu0
      %v1194 = vadd.f32 %v1109, %v1193
      %v1195 = vpop.f32.mrb[0].mxu0
      %v1196 = vpop.f32.mrb[0].mxu0
      %v1197 = vpop.f32.mrb[0].mxu0
      %1198 = vdwg.mxu0
      %1199 = vst [vmem:[%s224] sm:$0xff] %v1194
      %1200 = vst [vmem:[%s224 + $0x8] sm:$0xff] %v1082
      %p1201 = scmp.lt.s32.totalorder %s16, 1
      %s1202 = scalar_select %p1201, %s16, 1
      %s1203 = smul.addr %s1202, 2
      %s1204 = smul.addr %s1203, 8
      %s1205 = scalar_lea.vmem %s5, %s1204
      // Predicated region
      $region41: #{dan_forward.1} parent=39 // pred_check
        %p1206 = pneg %p144
      $region42: #{dan_forward.1} parent=39 // pred_check_branch
        %1208 = sbr.rel (%p1206) target = $region44
      $region43: #{dan_forward.1} parent=39 // pred_region
        _
      $region44: #{dan_forward.1} parent=39 // pred_fallthru
        _
    $region40: #{dan_forward.1} parent=5 // pred_fallthru
      _
    %p1209 = scmp.le.s32.totalorder 2, %s11
    // Predicated region
    $region45: #{dan_forward.1} parent=5 // pred_check
      %p1210 = pneg %p1209
    $region46: #{dan_forward.1} parent=5 // pred_check_branch
      %1212 = sbr.rel (%p1210) target = $region48
    $region47: #{dan_forward.1} parent=5 // pred_region
      %s1213 = ssub.s32 %s11, 2
      // Predicated region
      $region49: #{dan_forward.1} parent=47 // pred_check
        %p1214 = pneg %p150
      $region50: #{dan_forward.1} parent=47 // pred_check_branch
        %1216 = sbr.rel (%p1214) target = $region52
      $region51: #{dan_forward.1} parent=47 // pred_region
        %p1217 = scmp.lt.s32.totalorder %s17, 1
        %s1218 = scalar_select %p1217, %s17, 1
        %s1219 = smul.addr %s1218, 2
        %s1220 = smul.addr %s1219, 8
        %s1221 = scalar_lea.vmem %s5, %s1220
      $region52: #{dan_forward.1} parent=47 // pred_fallthru
        _
    $region48: #{dan_forward.1} parent=5 // pred_fallthru
      _
  $region6: #{dan_forward.1} parent=0 // loop_footer
    %s15 = sadd.s32 1, %s11
  $region7: #{dan_forward.1} parent=0 // loop_footer_branch
    %10 = sbr.rel target = $region3
  $region8: #{dan_forward.1} parent=0 // loop_exit
    _

</llo_original>
